<compile_context>
chip_gen: v6e
topology: v6e:2x2x1
jax: 0.10.0
libtpu: 0.0.40
codegen_flags: <defaults>
</compile_context>

<pallas_src>
import functools

import jax
import jax.numpy as jnp
from jax.experimental import pallas as pl
from jax.experimental.pallas import tpu as pltpu

LANE = 128
SUBLANE = 8
MAX_BLOCK_ROWS = 8192          # 8192 * 128 * 4 B = 4 MiB per f32 input block
INNER_CHUNK = 128              # rows per inner fori_loop step (16 vregs/temp)


def _sublane_multiple(dtype):
    # Packed sub-32-bit dtypes need more sublanes per tile: 16 for 2-byte
    # (bf16/f16), 32 for 1-byte (int8/fp8) dtypes.
    return {4: SUBLANE, 2: 2 * SUBLANE, 1: 4 * SUBLANE}.get(
        jnp.dtype(dtype).itemsize, SUBLANE)


def _num_tensorcores():
    # Split the leading grid axis across TensorCores only on chips that expose
    # two TCs to one program (v7x).  On single-TC chips (v5e/v6e) the split
    # would only add serial grid steps plus a wasted duplicate-block DMA.
    try:
        kind = jax.devices()[0].device_kind.lower()
    except Exception:
        return 1
    return 2 if "v7" in kind else 1


def _accumulate_block(p_ref, t_ref, sq_out, ab_out, nan_out, *, blk, rows,
                      block_rows, chunk, masked):
    """Stream one (block_rows, LANE) VMEM block in (chunk, LANE) sub-chunks."""
    g = chunk // SUBLANE
    n_chunks = block_rows // chunk

    def body(j, carry):
        sq, ab, nz = carry
        r0 = pl.multiple_of(j * chunk, chunk)
        p = p_ref[pl.ds(r0, chunk), :].astype(jnp.float32)
        t = t_ref[pl.ds(r0, chunk), :].astype(jnp.float32)
        if masked:
            # Zero rows past the real data so block-overhang garbage (possibly
            # NaN) and clamped duplicate blocks never contribute.
            rid = jax.lax.broadcasted_iota(jnp.int32, (chunk, LANE), 0)
            valid = (blk * block_rows + j * chunk + rid) < rows
            p = jnp.where(valid, p, 0.0)
            t = jnp.where(valid, t, 0.0)
        # NaN detection on *pred* only (matches torch.isnan(pred).any()).
        nan_f = (p != p).astype(jnp.float32)
        pc = jnp.clip(p, 0.0, 1.0)
        d = pc - t
        # Tile-preserving reshape; the leading-axis fold is plain VALU adds.
        sq = sq + (d * d).reshape(g, SUBLANE, LANE).sum(axis=0)
        ab = ab + jnp.abs(d).reshape(g, SUBLANE, LANE).sum(axis=0)
        nz = jnp.maximum(nz, nan_f.reshape(g, SUBLANE, LANE).max(axis=0))
        return sq, ab, nz

    zero = jnp.zeros((SUBLANE, LANE), jnp.float32)
    sq, ab, nz = jax.lax.fori_loop(0, n_chunks, body, (zero, zero, zero))
    sq_out[...] += sq
    ab_out[...] += ab
    nan_out[...] = jnp.maximum(nan_out[...], nz)


def _combined_loss_kernel(p_ref, t_ref, sq_out, ab_out, nan_out, *,
                          rows, block_rows, steps, chunk, needs_mask):
    c = pl.program_id(0)       # TensorCore split axis ("parallel")
    i = pl.program_id(1)       # streaming reduction axis ("arbitrary")

    @pl.when(i == 0)
    def _init():
        sq_out[...] = jnp.zeros_like(sq_out)
        ab_out[...] = jnp.zeros_like(ab_out)
        nan_out[...] = jnp.zeros_like(nan_out)

    blk = c * steps + i        # logical (un-clamped) block index
    acc = functools.partial(_accumulate_block, p_ref, t_ref, sq_out, ab_out,
                            nan_out, blk=blk, rows=rows,
                            block_rows=block_rows, chunk=chunk)

    if needs_mask:
        # Runtime gate: only the genuinely partial block (or a clamped
        # duplicate block) pays for the mask; full blocks take the lean path.
        is_partial = (blk + 1) * block_rows > rows

        @pl.when(is_partial)
        def _masked():
            acc(masked=True)

        @pl.when(jnp.logical_not(is_partial))
        def _full():
            acc(masked=False)
    else:
        acc(masked=False)


def combined_loss(pred, target):
    assert pred.shape == target.shape
    n_total = pred.size
    assert n_total > 0

    flat_p = pred.reshape(-1)      # contiguous reshape: free, native dtype
    flat_t = target.reshape(-1)

    sub_rows = max(_sublane_multiple(pred.dtype), _sublane_multiple(target.dtype))
    tile = sub_rows * LANE
    padded = pl.cdiv(n_total, tile) * tile
    if padded != n_total:
        # Zero padding contributes 0 to both error sums and is never NaN.
        flat_p = jnp.pad(flat_p, (0, padded - n_total))
        flat_t = jnp.pad(flat_t, (0, padded - n_total))
    rows = padded // LANE

    p2 = flat_p.reshape(rows, LANE)
    t2 = flat_t.reshape(rows, LANE)

    block_rows = min(rows, MAX_BLOCK_ROWS)     # multiple of sub_rows
    chunk = next(c for c in (INNER_CHUNK, 64, 32, 16, 8)
                 if c >= sub_rows and block_rows % c == 0)

    total_blocks = pl.cdiv(rows, block_rows)
    ncores = _num_tensorcores() if total_blocks >= 2 else 1
    steps = pl.cdiv(total_blocks, ncores)
    covered_rows = ncores * steps * block_rows
    needs_mask = covered_rows != rows

    if ncores * steps > total_blocks:
        # Some grid points map past the last block: clamp the DMA index (the
        # in-kernel mask zeroes their contribution via the *logical* index).
        def in_index(c, i):
            return (jnp.minimum(c * steps + i, total_blocks - 1), 0)
    else:
        def in_index(c, i):
            return (c * steps + i, 0)

    kernel = functools.partial(
        _combined_loss_kernel, rows=rows, block_rows=block_rows, steps=steps,
        chunk=chunk, needs_mask=needs_mask)

    part_shape = jax.ShapeDtypeStruct((ncores, SUBLANE, LANE), jnp.float32)
    part_spec = pl.BlockSpec((None, SUBLANE, LANE), lambda c, i: (c, 0, 0))

    in_bytes = (p2.size * p2.dtype.itemsize + t2.size * t2.dtype.itemsize)
    out_bytes = 3 * ncores * SUBLANE * LANE * 4
    cost = pl.CostEstimate(flops=8 * padded, transcendentals=0,
                           bytes_accessed=in_bytes + out_bytes)

    sq_part, ab_part, nan_part = pl.pallas_call(
        kernel,
        out_shape=(part_shape, part_shape, part_shape),
        grid_spec=pltpu.PrefetchScalarGridSpec(
            num_scalar_prefetch=0,
            grid=(ncores, steps),
            in_specs=[
                pl.BlockSpec((block_rows, LANE), in_index),
                pl.BlockSpec((block_rows, LANE), in_index),
            ],
            out_specs=(part_spec, part_spec, part_spec),
        ),
        # TODO(synk): if xprof on v7x shows one TensorCore idle, switch axis 0
        # to pltpu.CORE_PARALLEL (plain "parallel" may not shard across TCs).
        compiler_params=pltpu.CompilerParams(
            dimension_semantics=("parallel", "arbitrary"),
            vmem_limit_bytes=40 * 1024 * 1024),
        cost_estimate=cost,
    )(p2, t2)

    n = jnp.float32(n_total)
    mse = jnp.sum(sq_part) / n
    l1 = jnp.sum(ab_part) / n
    loss = mse + 0.5 * l1
    has_nan = jnp.sum(nan_part) > 0.0
    # TODO(synk): the NaN branch's gradient semantics (fresh requires_grad
    # tensor in PyTorch) are a training-loop concern; forward value only.
    return jnp.where(has_nan, jnp.float32(10.0), loss)


def combined_loss_ref(pred, target):
    pred = pred.astype(jnp.float32)
    target = target.astype(jnp.float32)
    pc = jnp.clip(pred, 0.0, 1.0)
    mse = jnp.mean((pc - target) ** 2)
    l1 = jnp.mean(jnp.abs(pc - target))
    return jnp.where(jnp.any(jnp.isnan(pred)), jnp.float32(10.0),
                     mse + 0.5 * l1)


if __name__ == "__main__":
    key = jax.random.PRNGKey(0)
    k1, k2, k3, k4 = jax.random.split(key, 4)

    # Module-scale test (NCHW [2,4,16,16]); pred overshoots [0,1] so the clamp
    # matters.
    pred = jax.random.uniform(k1, (2, 4, 16, 16), jnp.float32) * 1.4 - 0.2
    target = jax.random.uniform(k2, (2, 4, 16, 16), jnp.float32)
    out = jax.block_until_ready(combined_loss(pred, target))
    ref = jax.block_until_ready(combined_loss_ref(pred, target))
    assert jnp.allclose(out, ref, rtol=1e-5, atol=1e-6), (out, ref)

    # NaN fallback path (NaN in pred -> 10.0).
    pred_nan = pred.at[0, 0, 0, 0].set(jnp.nan)
    out_nan = jax.block_until_ready(combined_loss(pred_nan, target))
    assert jnp.allclose(out_nan, 10.0), out_nan

    # Larger shape exercising multi-block streaming, the inner chunk loop and
    # the runtime-gated tail mask (9600 rows -> one full + one partial block).
    pred_b = jax.random.uniform(k3, (2, 4, 512, 300), jnp.float32) * 1.6 - 0.3
    target_b = jax.random.uniform(k4, (2, 4, 512, 300), jnp.float32)
    out_b = jax.block_until_ready(combined_loss(pred_b, target_b))
    ref_b = jax.block_until_ready(combined_loss_ref(pred_b, target_b))
    assert jnp.allclose(out_b, ref_b, rtol=1e-3, atol=1e-5), (out_b, ref_b)

    print("KERNEL_OK")
</pallas_src>

<mosaic_0001>
module attributes {stable_mosaic.version = 11 : i64} {
  func.func @_combined_loss_kernel(%arg0: i32, %arg1: i32, %arg2: memref<16x128xf32, #tpu.memory_space<vmem>>, %arg3: memref<16x128xf32, #tpu.memory_space<vmem>>, %arg4: memref<1x8x128xf32, #tpu.memory_space<vmem>>, %arg5: memref<1x8x128xf32, #tpu.memory_space<vmem>>, %arg6: memref<1x8x128xf32, #tpu.memory_space<vmem>>) attributes {dimension_semantics = [#tpu.dimension_semantics<parallel>, #tpu.dimension_semantics<arbitrary>], iteration_bounds = array<i64: 1, 1>, scalar_prefetch = 0 : i64, scratch_operands = 0 : i64, tpu.core_type = #tpu.core_type<tc>, window_params = [{transform_indices = @transform_0, window_bounds = array<i64: 16, 128>}, {transform_indices = @transform_1, window_bounds = array<i64: 16, 128>}, {transform_indices = @transform_2, window_bounds = array<i64: 1, 8, 128>}, {transform_indices = @transform_3, window_bounds = array<i64: 1, 8, 128>}, {transform_indices = @transform_4, window_bounds = array<i64: 1, 8, 128>}]} {
    %c0_i32 = arith.constant 0 : i32
    %0 = arith.cmpi eq, %arg1, %c0_i32 : i32
    %1 = arith.extui %0 : i1 to i32
    %c0_i32_0 = arith.constant 0 : i32
    %2 = arith.cmpi ne, %1, %c0_i32_0 : i32
    scf.if %2 {
      %cst_26 = arith.constant 0.000000e+00 : f32
      %47 = vector.broadcast %cst_26 : f32 to vector<8x128xf32>
      %c0_27 = arith.constant 0 : index
      %c0_28 = arith.constant 0 : index
      %c0_29 = arith.constant 0 : index
      %48 = vector.load %arg4[%c0_27, %c0_28, %c0_29] : memref<1x8x128xf32, #tpu.memory_space<vmem>>, vector<1x8x128xf32>
      %49 = vector.shape_cast %48 : vector<1x8x128xf32> to vector<8x128xf32>
      %50 = vector.shape_cast %47 : vector<8x128xf32> to vector<1x8x128xf32>
      tpu.vector_store %arg4[%c0_27, %c0_28, %c0_29], %50 {strides = array<i32>} : memref<1x8x128xf32, #tpu.memory_space<vmem>>, vector<1x8x128xf32>,
      %cst_30 = arith.constant 0.000000e+00 : f32
      %51 = vector.broadcast %cst_30 : f32 to vector<8x128xf32>
      %c0_31 = arith.constant 0 : index
      %c0_32 = arith.constant 0 : index
      %c0_33 = arith.constant 0 : index
      %52 = vector.load %arg5[%c0_31, %c0_32, %c0_33] : memref<1x8x128xf32, #tpu.memory_space<vmem>>, vector<1x8x128xf32>
      %53 = vector.shape_cast %52 : vector<1x8x128xf32> to vector<8x128xf32>
      %54 = vector.shape_cast %51 : vector<8x128xf32> to vector<1x8x128xf32>
      tpu.vector_store %arg5[%c0_31, %c0_32, %c0_33], %54 {strides = array<i32>} : memref<1x8x128xf32, #tpu.memory_space<vmem>>, vector<1x8x128xf32>,
      %cst_34 = arith.constant 0.000000e+00 : f32
      %55 = vector.broadcast %cst_34 : f32 to vector<8x128xf32>
      %c0_35 = arith.constant 0 : index
      %c0_36 = arith.constant 0 : index
      %c0_37 = arith.constant 0 : index
      %56 = vector.load %arg6[%c0_35, %c0_36, %c0_37] : memref<1x8x128xf32, #tpu.memory_space<vmem>>, vector<1x8x128xf32>
      %57 = vector.shape_cast %56 : vector<1x8x128xf32> to vector<8x128xf32>
      %58 = vector.shape_cast %55 : vector<8x128xf32> to vector<1x8x128xf32>
      tpu.vector_store %arg6[%c0_35, %c0_36, %c0_37], %58 {strides = array<i32>} : memref<1x8x128xf32, #tpu.memory_space<vmem>>, vector<1x8x128xf32>,
    } else {
    }
    %cst = arith.constant 0.000000e+00 : f32
    %3 = vector.broadcast %cst : f32 to vector<8x128xf32>
    %c0_i32_1 = arith.constant 0 : i32
    %c16_i32 = arith.constant 16 : i32
    %4 = arith.muli %c0_i32_1, %c16_i32 : i32
    %5 = tpu.assume_multiple %4, 16 : i32
    %6 = arith.index_cast %5 : i32 to index
    %c0 = arith.constant 0 : index
    %7 = vector.load %arg2[%6, %c0] : memref<16x128xf32, #tpu.memory_space<vmem>>, vector<16x128xf32>
    %8 = arith.index_cast %5 : i32 to index
    %c0_2 = arith.constant 0 : index
    %9 = vector.load %arg3[%8, %c0_2] : memref<16x128xf32, #tpu.memory_space<vmem>>, vector<16x128xf32>
    %10 = arith.cmpf one, %7, %7 : vector<16x128xf32>
    %11 = arith.extui %10 : vector<16x128xi1> to vector<16x128xi32>
    %12 = arith.sitofp %11 : vector<16x128xi32> to vector<16x128xf32>
    %cst_3 = arith.constant 0.000000e+00 : f32
    %cst_4 = arith.constant 1.000000e+00 : f32
    %13 = vector.broadcast %cst_3 : f32 to vector<16x128xf32>
    %14 = arith.maximumf %13, %7 : vector<16x128xf32>
    %15 = vector.broadcast %cst_4 : f32 to vector<16x128xf32>
    %16 = arith.minimumf %15, %14 : vector<16x128xf32>
    %17 = arith.subf %16, %9 : vector<16x128xf32>
    %18 = arith.mulf %17, %17 : vector<16x128xf32>
    %19 = vector.shape_cast %18 : vector<16x128xf32> to vector<2x8x128xf32>
    %cst_5 = arith.constant dense<0.000000e+00> : vector<8x128xf32>
    %20 = vector.multi_reduction <add>, %19, %cst_5 [0] : vector<2x8x128xf32> to vector<8x128xf32>
    %21 = arith.addf %3, %20 : vector<8x128xf32>
    %22 = math.absf %17 : vector<16x128xf32>
    %23 = vector.shape_cast %22 : vector<16x128xf32> to vector<2x8x128xf32>
    %cst_6 = arith.constant dense<0.000000e+00> : vector<8x128xf32>
    %24 = vector.multi_reduction <add>, %23, %cst_6 [0] : vector<2x8x128xf32> to vector<8x128xf32>
    %25 = arith.addf %3, %24 : vector<8x128xf32>
    %26 = vector.shape_cast %12 : vector<16x128xf32> to vector<2x8x128xf32>
    %cst_7 = arith.constant dense<0xFF800000> : vector<8x128xf32>
    %27 = vector.multi_reduction <maximumf>, %26, %cst_7 [0] : vector<2x8x128xf32> to vector<8x128xf32>
    %28 = arith.maximumf %3, %27 : vector<8x128xf32>
    %c1_i32 = arith.constant 1 : i32
    %c0_8 = arith.constant 0 : index
    %c0_9 = arith.constant 0 : index
    %c0_10 = arith.constant 0 : index
    %29 = vector.load %arg4[%c0_8, %c0_9, %c0_10] : memref<1x8x128xf32, #tpu.memory_space<vmem>>, vector<1x8x128xf32>
    %30 = vector.shape_cast %29 : vector<1x8x128xf32> to vector<8x128xf32>
    %31 = arith.addf %30, %21 : vector<8x128xf32>
    %c0_11 = arith.constant 0 : index
    %c0_12 = arith.constant 0 : index
    %c0_13 = arith.constant 0 : index
    %32 = vector.load %arg4[%c0_11, %c0_12, %c0_13] : memref<1x8x128xf32, #tpu.memory_space<vmem>>, vector<1x8x128xf32>
    %33 = vector.shape_cast %32 : vector<1x8x128xf32> to vector<8x128xf32>
    %34 = vector.shape_cast %31 : vector<8x128xf32> to vector<1x8x128xf32>
    tpu.vector_store %arg4[%c0_11, %c0_12, %c0_13], %34 {strides = array<i32>} : memref<1x8x128xf32, #tpu.memory_space<vmem>>, vector<1x8x128xf32>,
    %c0_14 = arith.constant 0 : index
    %c0_15 = arith.constant 0 : index
    %c0_16 = arith.constant 0 : index
    %35 = vector.load %arg5[%c0_14, %c0_15, %c0_16] : memref<1x8x128xf32, #tpu.memory_space<vmem>>, vector<1x8x128xf32>
    %36 = vector.shape_cast %35 : vector<1x8x128xf32> to vector<8x128xf32>
    %37 = arith.addf %36, %25 : vector<8x128xf32>
    %c0_17 = arith.constant 0 : index
    %c0_18 = arith.constant 0 : index
    %c0_19 = arith.constant 0 : index
    %38 = vector.load %arg5[%c0_17, %c0_18, %c0_19] : memref<1x8x128xf32, #tpu.memory_space<vmem>>, vector<1x8x128xf32>
    %39 = vector.shape_cast %38 : vector<1x8x128xf32> to vector<8x128xf32>
    %40 = vector.shape_cast %37 : vector<8x128xf32> to vector<1x8x128xf32>
    tpu.vector_store %arg5[%c0_17, %c0_18, %c0_19], %40 {strides = array<i32>} : memref<1x8x128xf32, #tpu.memory_space<vmem>>, vector<1x8x128xf32>,
    %c0_20 = arith.constant 0 : index
    %c0_21 = arith.constant 0 : index
    %c0_22 = arith.constant 0 : index
    %41 = vector.load %arg6[%c0_20, %c0_21, %c0_22] : memref<1x8x128xf32, #tpu.memory_space<vmem>>, vector<1x8x128xf32>
    %42 = vector.shape_cast %41 : vector<1x8x128xf32> to vector<8x128xf32>
    %43 = arith.maximumf %42, %28 : vector<8x128xf32>
    %c0_23 = arith.constant 0 : index
    %c0_24 = arith.constant 0 : index
    %c0_25 = arith.constant 0 : index
    %44 = vector.load %arg6[%c0_23, %c0_24, %c0_25] : memref<1x8x128xf32, #tpu.memory_space<vmem>>, vector<1x8x128xf32>
    %45 = vector.shape_cast %44 : vector<1x8x128xf32> to vector<8x128xf32>
    %46 = vector.shape_cast %43 : vector<8x128xf32> to vector<1x8x128xf32>
    tpu.vector_store %arg6[%c0_23, %c0_24, %c0_25], %46 {strides = array<i32>} : memref<1x8x128xf32, #tpu.memory_space<vmem>>, vector<1x8x128xf32>,
    return
  }
  func.func @transform_0(%arg0: i32, %arg1: i32) -> (i32, i32) {
    %c1_i32 = arith.constant 1 : i32
    %0 = arith.muli %arg0, %c1_i32 : i32
    %1 = arith.addi %0, %arg1 : i32
    %c0_i32 = arith.constant 0 : i32
    %c0_i32_0 = arith.constant 0 : i32
    return %1, %c0_i32 : i32, i32
  }
  func.func @transform_1(%arg0: i32, %arg1: i32) -> (i32, i32) {
    %c1_i32 = arith.constant 1 : i32
    %0 = arith.muli %arg0, %c1_i32 : i32
    %1 = arith.addi %0, %arg1 : i32
    %c0_i32 = arith.constant 0 : i32
    %c0_i32_0 = arith.constant 0 : i32
    return %1, %c0_i32 : i32, i32
  }
  func.func @transform_2(%arg0: i32, %arg1: i32) -> (i32, i32, i32) {
    %c0_i32 = arith.constant 0 : i32
    %c0_i32_0 = arith.constant 0 : i32
    %c0_i32_1 = arith.constant 0 : i32
    return %arg0, %c0_i32, %c0_i32_0 : i32, i32, i32
  }
  func.func @transform_3(%arg0: i32, %arg1: i32) -> (i32, i32, i32) {
    %c0_i32 = arith.constant 0 : i32
    %c0_i32_0 = arith.constant 0 : i32
    %c0_i32_1 = arith.constant 0 : i32
    return %arg0, %c0_i32, %c0_i32_0 : i32, i32, i32
  }
  func.func @transform_4(%arg0: i32, %arg1: i32) -> (i32, i32, i32) {
    %c0_i32 = arith.constant 0 : i32
    %c0_i32_0 = arith.constant 0 : i32
    %c0_i32_1 = arith.constant 0 : i32
    return %arg0, %c0_i32, %c0_i32_0 : i32, i32, i32
  }
}

</mosaic_0001>

<llo_original>
// kernel: tpu_custom_call.1
$region0: #{tpu_custom_call.1}
  #allocation0 [shape = 'u32[]', space=smem, size = 0x4, offset = 0x4, fixed_abs, tag = 'smem constant byte address 0x4 - core index']
  #allocation1 [shape = 'u32[144,128]{1,0:T(1,128)}', space=vmem, size = 0x12000, scoped, tag = 'internal scratch']
  %s0 = inlined_call_operand.hbm [shape: f32[16,128], index: 0, kind: input, shape index: {}]
  %s1 = inlined_call_operand.hbm [shape: f32[16,128], index: 1, kind: input, shape index: {}]
  %s2 = inlined_call_operand.hbm [shape: f32[1,8,128], index: 2, kind: output, shape index: {0}]
  %s3 = inlined_call_operand.hbm [shape: f32[1,8,128], index: 3, kind: output, shape index: {1}]
  %s4 = inlined_call_operand.hbm [shape: f32[1,8,128], index: 4, kind: output, shape index: {2}]
  %5 = xla_tuple %s2, %s3, %s4
  %s6 = sld [smem:[#allocation0]]
  $region46: #{tpu_custom_call.1} parent=0
    _
  %s8 = ssub.s32 1, %s6
  %s9 = scalar_select 0, %s8, %s6
  $region1: #{tpu_custom_call.1} parent=0
    #allocation2 [shape = 'u8[8192]{0}', space=vmem, size = 0x2000, scoped, tag = 'input window, operand 0, single buffered']
    #allocation3 [shape = 's32[1]{0}', space=sflag, size = 0x4, scoped, tag = 'scoped memory for tpu_custom_call.1']
    #allocation4 [shape = 's32[1]{0}', space=sflag, size = 0x4, scoped, tag = 'scoped memory for tpu_custom_call.1']
    #allocation5 [shape = 'u8[8192]{0}', space=vmem, size = 0x2000, scoped, tag = 'input window, operand 1, single buffered']
    #allocation6 [shape = 's32[1]{0}', space=sflag, size = 0x4, scoped, tag = 'scoped memory for tpu_custom_call.1']
    #allocation7 [shape = 'u8[4096]{0}', space=vmem, size = 0x1000, scoped, tag = 'output window, operand 0, single buffered']
    #allocation8 [shape = 'u8[4096]{0}', space=vmem, size = 0x1000, scoped, tag = 'output window, operand 1, single buffered']
    #allocation9 [shape = 's32[1]{0}', space=sflag, size = 0x4, scoped, tag = 'scoped memory for tpu_custom_call.1']
    #allocation10 [shape = 'u8[4096]{0}', space=vmem, size = 0x1000, scoped, tag = 'output window, operand 2, single buffered']
    %10 = vsyncpa [#allocation3], 0
    %11 = vsyncpa [#allocation6], 0
    %12 = vsyncpa [#allocation4], 0
    %13 = vsyncpa [#allocation9], 0
    // Predicated region
    $region2: #{tpu_custom_call.1} parent=1 // pred_check
      _
    $region3: #{tpu_custom_call.1} parent=1 // pred_check_branch
      %15 = sbr.rel (0) target = $region5
    $region4: #{tpu_custom_call.1} parent=1 // pred_region
      %s16 = sadd.s32 0, 0
      %s17 = smul.u32 2, %s16
      %s19 = ssub.s32 256, 256
      %20 = vsyncadd [#allocation3], %s19
      %s21 = smul.addr %s17, 128
      %s22 = scalar_lea.hbm %s0, %s21
      %s23 = sshll.u32 [#allocation2], 4
      %s24 = int_to_ptr.vmem [resolvable:$true] %s23
      %29 = dma.hbm_to_vmem [thread:$0]  %s22, 256, %s24, [#allocation3], 128, 128, 8
    $region5: #{tpu_custom_call.1} parent=1 // pred_fallthru
      _
    // Predicated region
    $region6: #{tpu_custom_call.1} parent=1 // pred_check
      _
    $region7: #{tpu_custom_call.1} parent=1 // pred_check_branch
      %31 = sbr.rel (0) target = $region9
    $region8: #{tpu_custom_call.1} parent=1 // pred_region
      %s32 = sadd.s32 0, 0
      %s33 = smul.u32 2, %s32
      %s35 = ssub.s32 256, 256
      %36 = vsyncadd [#allocation6], %s35
      %s37 = smul.addr %s33, 128
      %s38 = scalar_lea.hbm %s1, %s37
      %s39 = sshll.u32 [#allocation5], 4
      %s40 = int_to_ptr.vmem [resolvable:$true] %s39
      %45 = dma.hbm_to_vmem [thread:$0]  %s38, 256, %s40, [#allocation6], 128, 128, 8
    $region9: #{tpu_custom_call.1} parent=1 // pred_fallthru
      _
    // Predicated region
    $region10: #{tpu_custom_call.1} parent=1 // pred_check
      _
    $region11: #{tpu_custom_call.1} parent=1 // pred_check_branch
      %47 = sbr.rel (0) target = $region13
    $region12: #{tpu_custom_call.1} parent=1 // pred_region
      %48 = dma.done [#allocation3], 256
    $region13: #{tpu_custom_call.1} parent=1 // pred_fallthru
      _
    // Predicated region
    $region14: #{tpu_custom_call.1} parent=1 // pred_check
      _
    $region15: #{tpu_custom_call.1} parent=1 // pred_check_branch
      %50 = sbr.rel (0) target = $region17
    $region16: #{tpu_custom_call.1} parent=1 // pred_region
      %51 = dma.done [#allocation6], 256
    $region17: #{tpu_custom_call.1} parent=1 // pred_fallthru
      _
    %s52 = sadd.s32 0, 0
    %s53 = smul.u32 2, %s52
    %s54 = sadd.s32 0, 0
    %s55 = smul.u32 2, %s54
    %p56 = scmp.eq.s32.totalorder 0, 0
    // Predicated region
    $region18: #{tpu_custom_call.1} parent=1 // pred_check
      %p57 = pneg %p56
    $region19: #{tpu_custom_call.1} parent=1 // pred_check_branch
      %59 = sbr.rel (%p57) target = $region21
    $region20: #{tpu_custom_call.1} parent=1 // pred_region
      %60 = vst [vmem:[#allocation7] sm:$0xff] 0.0
      %61 = vst [vmem:[#allocation8] sm:$0xff] 0.0
      %62 = vst [vmem:[#allocation10] sm:$0xff] 0.0
    $region21: #{tpu_custom_call.1} parent=1 // pred_fallthru
      _
    %v63 = vld [vmem:[#allocation2] sm:$0xff]
    %v64 = vld [vmem:[#allocation2 + $0x8] sm:$0xff]
    %v65 = vld [vmem:[#allocation5] sm:$0xff]
    %v66 = vld [vmem:[#allocation5 + $0x8] sm:$0xff]
    %vm67 = vcmp.ne.f32.partialorder %v63, %v63
    %vm68 = vcmp.ne.f32.partialorder %v64, %v64
    %v69 = vsel %vm67, 1, 0
    %v70 = vsel %vm68, 1, 0
    %v71 = vcvt.s32.f32 %v69
    %v72 = vcvt.s32.f32 %v70
    %v73 = vmax.f32 %v63, 0.0
    %v74 = vmax.f32 %v64, 0.0
    %v75 = vmin.f32 %v73, 1.0
    %v76 = vmin.f32 %v74, 1.0
    %v77 = vsub.f32 %v75, %v65
    %v78 = vsub.f32 %v76, %v66
    %v79 = vmul.f32 %v77, %v77
    %v80 = vmul.f32 %v78, %v78
    %v81 = vadd.f32 %v79, %v80
    %v82 = vadd.f32 %v81, 0.0
    %v83 = vand.u32 2147483647, %v77
    %v84 = vand.u32 2147483647, %v78
    %v85 = vadd.f32 %v83, %v84
    %v86 = vadd.f32 %v85, 0.0
    %v87 = vmax.f32 %v71, %v72
    %v88 = vmax.f32 %v87, 0.0
    %v89 = vld [vmem:[#allocation7] sm:$0xff]
    %v90 = vadd.f32 %v89, %v82
    %91 = vst [vmem:[#allocation7] sm:$0xff] %v90
    %v92 = vld [vmem:[#allocation8] sm:$0xff]
    %v93 = vadd.f32 %v92, %v86
    %94 = vst [vmem:[#allocation8] sm:$0xff] %v93
    %v95 = vld [vmem:[#allocation10] sm:$0xff]
    %v96 = vmax.f32 %v95, %v88
    %97 = vst [vmem:[#allocation10] sm:$0xff] %v96
    // Predicated region
    $region22: #{tpu_custom_call.1} parent=1 // pred_check
      _
    $region23: #{tpu_custom_call.1} parent=1 // pred_check_branch
      %99 = sbr.rel (0) target = $region25
    $region24: #{tpu_custom_call.1} parent=1 // pred_region
      %s101 = ssub.s32 128, 128
      %102 = vsyncadd [#allocation4], %s101
      %s104 = sshll.u32 [#allocation7], 4
      %s105 = int_to_ptr.vmem [resolvable:$true] %s104
      %107 = dma.vmem_to_hbm [thread:$0]  %s105, 128, %s2, [#allocation4]
    $region25: #{tpu_custom_call.1} parent=1 // pred_fallthru
      _
    // Predicated region
    $region26: #{tpu_custom_call.1} parent=1 // pred_check
      _
    $region27: #{tpu_custom_call.1} parent=1 // pred_check_branch
      %109 = sbr.rel (0) target = $region29
    $region28: #{tpu_custom_call.1} parent=1 // pred_region
      %s111 = ssub.s32 128, 128
      %112 = vsyncadd [#allocation9], %s111
      %s114 = sshll.u32 [#allocation8], 4
      %s115 = int_to_ptr.vmem [resolvable:$true] %s114
      %117 = dma.vmem_to_hbm [thread:$0]  %s115, 128, %s3, [#allocation9]
    $region29: #{tpu_custom_call.1} parent=1 // pred_fallthru
      _
    // Predicated region
    $region30: #{tpu_custom_call.1} parent=1 // pred_check
      _
    $region31: #{tpu_custom_call.1} parent=1 // pred_check_branch
      %119 = sbr.rel (0) target = $region33
    $region32: #{tpu_custom_call.1} parent=1 // pred_region
      %s121 = ssub.s32 128, 128
      %122 = vsyncadd [#allocation9], %s121
      %s124 = sshll.u32 [#allocation10], 4
      %s125 = int_to_ptr.vmem [resolvable:$true] %s124
      %127 = dma.vmem_to_hbm [thread:$0]  %s125, 128, %s4, [#allocation9]
    $region33: #{tpu_custom_call.1} parent=1 // pred_fallthru
      _
    // Predicated region
    $region34: #{tpu_custom_call.1} parent=1 // pred_check
      _
    $region35: #{tpu_custom_call.1} parent=1 // pred_check_branch
      %129 = sbr.rel (0) target = $region37
    $region36: #{tpu_custom_call.1} parent=1 // pred_region
      %130 = dma.done [#allocation4], 128
    $region37: #{tpu_custom_call.1} parent=1 // pred_fallthru
      _
    // Predicated region
    $region38: #{tpu_custom_call.1} parent=1 // pred_check
      _
    $region39: #{tpu_custom_call.1} parent=1 // pred_check_branch
      %132 = sbr.rel (0) target = $region41
    $region40: #{tpu_custom_call.1} parent=1 // pred_region
      %133 = dma.done [#allocation9], 128
    $region41: #{tpu_custom_call.1} parent=1 // pred_fallthru
      _
    // Predicated region
    $region42: #{tpu_custom_call.1} parent=1 // pred_check
      _
    $region43: #{tpu_custom_call.1} parent=1 // pred_check_branch
      %135 = sbr.rel (0) target = $region45
    $region44: #{tpu_custom_call.1} parent=1 // pred_region
      %136 = dma.done [#allocation9], 128
    $region45: #{tpu_custom_call.1} parent=1 // pred_fallthru
      _
    %137 = vsyncpa [#allocation3], 1
    %138 = vsyncpa [#allocation6], 1
    %139 = vsyncpa [#allocation4], 1
    %140 = vsyncpa [#allocation9], 1

</llo_original>
